<compile_context>
chip_gen: v7x
topology: tpu7x:2x2x1
jax: 0.10.0
libtpu: 0.0.40
codegen_flags: <defaults>
</compile_context>

<pallas_src>
import jax
import jax.numpy as jnp
from jax.experimental import pallas as pl
from jax.experimental.pallas import tpu as pltpu

INPUT_DIM = 4     # CartPole-v1 observation_space.shape[0]
OUTPUT_DIM = 2    # CartPole-v1 action_space.n
H1 = 128
H2 = 256


def dqn_kernel(xt_ref, w1t_ref, b1t_ref, w2t_ref, b2t_ref, w3t_ref, b3t_ref, ot_ref):
    # xt: (4, TILE_B)   w1t: (128, 4)   w2t: (256, 128)   w3t: (2, 256)
    xt = xt_ref[...]
    w1t = w1t_ref[...]

    # ---- Layer 1 on the VPU (K=4 is far too small for an MXU pass) ----
    # h1^T[n, b] = sum_k w1t[n, k] * xt[k, b] + b1[n], balanced-tree FMAs.
    t01 = w1t[:, 0:1] * xt[0:1, :] + b1t_ref[...]
    t01 = t01 + w1t[:, 1:2] * xt[1:2, :]
    t23 = w1t[:, 2:3] * xt[2:3, :] + w1t[:, 3:4] * xt[3:4, :]
    h1 = jnp.maximum(t01 + t23, 0.0)                                  # (128, TILE_B)

    # ---- Layers 2 and 3 on the MXU with f32 accumulation ----
    h2 = jnp.dot(w2t_ref[...], h1, preferred_element_type=jnp.float32) + b2t_ref[...]
    h2 = jnp.maximum(h2, 0.0)                                         # (256, TILE_B)
    out = jnp.dot(w3t_ref[...], h2, preferred_element_type=jnp.float32) + b3t_ref[...]

    # Lane-dense (OUTPUT_DIM, TILE_B) store; batch is on the lane axis.
    ot_ref[...] = out.astype(ot_ref.dtype)


def _round_up(n, m):
    return ((n + m - 1) // m) * m


def prepare_params(params):
    """One-time parameter prep (hoisted out of the per-call hot path)."""
    w1, b1, w2, b2, w3, b3 = params
    w1t = jnp.asarray(w1).T                       # (128, 4)
    w2t = jnp.asarray(w2).T                       # (256, 128)
    w3t = jnp.asarray(w3).T                       # (2, 256)
    b1t = jnp.asarray(b1).reshape(H1, 1)          # (128, 1)
    b2t = jnp.asarray(b2).reshape(H2, 1)          # (256, 1)
    b3t = jnp.asarray(b3).reshape(OUTPUT_DIM, 1)  # (2, 1)
    return (w1t, b1t, w2t, b2t, w3t, b3t)


def _choose_tile(B, big_tile):
    """Batch tile: big tiles amortize per-grid-step overhead, but keep >=2 grid
    steps whenever the batch allows it so both v7x TensorCores get work."""
    Bp0 = max(_round_up(B, 128), 128)
    if Bp0 <= 128:
        return 128
    return max(128, min(big_tile, _round_up(Bp0 // 2, 128)))


def dqn_forward(x, prepared_params, big_tile=1024):
    w1t, b1t, w2t, b2t, w3t, b3t = prepared_params
    B = x.shape[0]

    TILE_B = _choose_tile(B, big_tile)
    Bp = _round_up(B, TILE_B)

    # Layout plumbing only: batch goes on the lane axis.
    xt = x.T                                       # (4, B)
    if Bp != B:
        xt = jnp.pad(xt, ((0, 0), (0, Bp - B)))

    resident = lambda arr: pl.BlockSpec(arr.shape, lambda i: (0, 0))  # VMEM-resident

    out_t = pl.pallas_call(
        dqn_kernel,
        out_shape=jax.ShapeDtypeStruct((OUTPUT_DIM, Bp), jnp.float32),
        grid=(Bp // TILE_B,),
        in_specs=[
            pl.BlockSpec((INPUT_DIM, TILE_B), lambda i: (0, i)),   # x^T: tiled over batch lanes
            resident(w1t), resident(b1t),
            resident(w2t), resident(b2t),
            resident(w3t), resident(b3t),
        ],
        out_specs=pl.BlockSpec((OUTPUT_DIM, TILE_B), lambda i: (0, i)),
        compiler_params=pltpu.CompilerParams(
            dimension_semantics=("parallel",),
        ),
    )(xt, w1t, b1t, w2t, b2t, w3t, b3t)

    return out_t[:, :B].T                          # (B, OUTPUT_DIM)


def init_params(key):
    # PyTorch nn.Linear default init: U(-1/sqrt(fan_in), 1/sqrt(fan_in))
    def linear(key, fan_in, fan_out):
        kw, kb = jax.random.split(key)
        bound = 1.0 / jnp.sqrt(fan_in)
        w = jax.random.uniform(kw, (fan_in, fan_out), jnp.float32, -bound, bound)
        b = jax.random.uniform(kb, (1, fan_out), jnp.float32, -bound, bound)
        return w, b

    k1, k2, k3 = jax.random.split(key, 3)
    w1, b1 = linear(k1, INPUT_DIM, H1)
    w2, b2 = linear(k2, H1, H2)
    w3, b3 = linear(k3, H2, OUTPUT_DIM)
    return (w1, b1, w2, b2, w3, b3)


def dqn_reference(x, params):
    w1, b1, w2, b2, w3, b3 = params
    h1 = jnp.maximum(x @ w1 + b1, 0.0)
    h2 = jnp.maximum(h1 @ w2 + b2, 0.0)
    return h2 @ w3 + b3


if __name__ == "__main__":
    key = jax.random.PRNGKey(0)
    kx, kp = jax.random.split(key)
    params = init_params(kp)
    prepared = prepare_params(params)   # one-time prep, out of the hot path

    # Small env-loop-like batch (single 128-lane tile).
    B = 8
    x = jax.random.normal(kx, (B, INPUT_DIM), dtype=jnp.float32)
    out = dqn_forward(x, prepared)
    jax.block_until_ready(out)
    ref = dqn_reference(x, params)
    assert out.shape == (B, OUTPUT_DIM)
    assert jnp.allclose(out, ref, atol=1e-5, rtol=1e-5)

    # Replay-buffer-sized batch: big tile (1024), 2 grid steps, uneven batch padding.
    B2 = 2000
    x2 = jax.random.normal(jax.random.PRNGKey(1), (B2, INPUT_DIM), dtype=jnp.float32)
    out2 = dqn_forward(x2, prepared)
    jax.block_until_ready(out2)
    ref2 = dqn_reference(x2, params)
    assert out2.shape == (B2, OUTPUT_DIM)
    assert jnp.allclose(out2, ref2, atol=1e-5, rtol=1e-5)

    print("KERNEL_OK")
</pallas_src>

<mosaic_0001>
module attributes {stable_mosaic.version = 11 : i64} {
  func.func @dqn_kernel(%arg0: i32, %arg1: memref<4x128xf32, #tpu.memory_space<vmem>>, %arg2: memref<128x4xf32, #tpu.memory_space<vmem>>, %arg3: memref<128x1xf32, #tpu.memory_space<vmem>>, %arg4: memref<256x128xf32, #tpu.memory_space<vmem>>, %arg5: memref<256x1xf32, #tpu.memory_space<vmem>>, %arg6: memref<2x256xf32, #tpu.memory_space<vmem>>, %arg7: memref<2x1xf32, #tpu.memory_space<vmem>>, %arg8: memref<2x128xf32, #tpu.memory_space<vmem>>) attributes {dimension_semantics = [#tpu.dimension_semantics<parallel>], iteration_bounds = array<i64: 1>, scalar_prefetch = 0 : i64, scratch_operands = 0 : i64, tpu.core_type = #tpu.core_type<tc>, window_params = [{transform_indices = @transform_0, window_bounds = array<i64: 4, 128>}, {pipeline_mode = #tpu.pipeline_mode<synchronous>, transform_indices = @transform_1, window_bounds = array<i64: 128, 4>}, {pipeline_mode = #tpu.pipeline_mode<synchronous>, transform_indices = @transform_2, window_bounds = array<i64: 128, 1>}, {pipeline_mode = #tpu.pipeline_mode<synchronous>, transform_indices = @transform_3, window_bounds = array<i64: 256, 128>}, {pipeline_mode = #tpu.pipeline_mode<synchronous>, transform_indices = @transform_4, window_bounds = array<i64: 256, 1>}, {pipeline_mode = #tpu.pipeline_mode<synchronous>, transform_indices = @transform_5, window_bounds = array<i64: 2, 256>}, {pipeline_mode = #tpu.pipeline_mode<synchronous>, transform_indices = @transform_6, window_bounds = array<i64: 2, 1>}, {transform_indices = @transform_7, window_bounds = array<i64: 2, 128>}]} {
    %c0 = arith.constant 0 : index
    %c0_0 = arith.constant 0 : index
    %0 = vector.load %arg1[%c0, %c0_0] : memref<4x128xf32, #tpu.memory_space<vmem>>, vector<4x128xf32>
    %c0_1 = arith.constant 0 : index
    %c0_2 = arith.constant 0 : index
    %1 = vector.load %arg2[%c0_1, %c0_2] : memref<128x4xf32, #tpu.memory_space<vmem>>, vector<128x4xf32>
    %2 = vector.extract_strided_slice %1 {offsets = [0, 0], sizes = [128, 1], strides = [1, 1]} : vector<128x4xf32> to vector<128x1xf32>
    %3 = vector.extract_strided_slice %0 {offsets = [0, 0], sizes = [1, 128], strides = [1, 1]} : vector<4x128xf32> to vector<1x128xf32>
    %4 = vector.broadcast %2 : vector<128x1xf32> to vector<128x128xf32>
    %5 = vector.broadcast %3 : vector<1x128xf32> to vector<128x128xf32>
    %6 = arith.mulf %4, %5 : vector<128x128xf32>
    %c0_3 = arith.constant 0 : index
    %c0_4 = arith.constant 0 : index
    %7 = vector.load %arg3[%c0_3, %c0_4] : memref<128x1xf32, #tpu.memory_space<vmem>>, vector<128x1xf32>
    %8 = vector.broadcast %7 : vector<128x1xf32> to vector<128x128xf32>
    %9 = arith.addf %6, %8 : vector<128x128xf32>
    %10 = vector.extract_strided_slice %1 {offsets = [0, 1], sizes = [128, 1], strides = [1, 1]} : vector<128x4xf32> to vector<128x1xf32>
    %11 = vector.extract_strided_slice %0 {offsets = [1, 0], sizes = [1, 128], strides = [1, 1]} : vector<4x128xf32> to vector<1x128xf32>
    %12 = vector.broadcast %10 : vector<128x1xf32> to vector<128x128xf32>
    %13 = vector.broadcast %11 : vector<1x128xf32> to vector<128x128xf32>
    %14 = arith.mulf %12, %13 : vector<128x128xf32>
    %15 = arith.addf %9, %14 : vector<128x128xf32>
    %16 = vector.extract_strided_slice %1 {offsets = [0, 2], sizes = [128, 1], strides = [1, 1]} : vector<128x4xf32> to vector<128x1xf32>
    %17 = vector.extract_strided_slice %0 {offsets = [2, 0], sizes = [1, 128], strides = [1, 1]} : vector<4x128xf32> to vector<1x128xf32>
    %18 = vector.broadcast %16 : vector<128x1xf32> to vector<128x128xf32>
    %19 = vector.broadcast %17 : vector<1x128xf32> to vector<128x128xf32>
    %20 = arith.mulf %18, %19 : vector<128x128xf32>
    %21 = vector.extract_strided_slice %1 {offsets = [0, 3], sizes = [128, 1], strides = [1, 1]} : vector<128x4xf32> to vector<128x1xf32>
    %22 = vector.extract_strided_slice %0 {offsets = [3, 0], sizes = [1, 128], strides = [1, 1]} : vector<4x128xf32> to vector<1x128xf32>
    %23 = vector.broadcast %21 : vector<128x1xf32> to vector<128x128xf32>
    %24 = vector.broadcast %22 : vector<1x128xf32> to vector<128x128xf32>
    %25 = arith.mulf %23, %24 : vector<128x128xf32>
    %26 = arith.addf %20, %25 : vector<128x128xf32>
    %27 = arith.addf %15, %26 : vector<128x128xf32>
    %cst = arith.constant 0.000000e+00 : f32
    %28 = vector.broadcast %cst : f32 to vector<128x128xf32>
    %29 = arith.maximumf %27, %28 : vector<128x128xf32>
    %c0_5 = arith.constant 0 : index
    %c0_6 = arith.constant 0 : index
    %30 = vector.load %arg4[%c0_5, %c0_6] : memref<256x128xf32, #tpu.memory_space<vmem>>, vector<256x128xf32>
    %cst_7 = arith.constant dense<0.000000e+00> : vector<256x128xf32>
    %31 = tpu.matmul %30, %29, %cst_7 {dimension_numbers = #tpu.dot_dimension_numbers<[1], [0], [0], [1], [0, 0, 1, 1], [], []>} : vector<256x128xf32>, vector<128x128xf32>, vector<256x128xf32> -> vector<256x128xf32>
    %c0_8 = arith.constant 0 : index
    %c0_9 = arith.constant 0 : index
    %32 = vector.load %arg5[%c0_8, %c0_9] : memref<256x1xf32, #tpu.memory_space<vmem>>, vector<256x1xf32>
    %33 = vector.broadcast %32 : vector<256x1xf32> to vector<256x128xf32>
    %34 = arith.addf %31, %33 : vector<256x128xf32>
    %cst_10 = arith.constant 0.000000e+00 : f32
    %35 = vector.broadcast %cst_10 : f32 to vector<256x128xf32>
    %36 = arith.maximumf %34, %35 : vector<256x128xf32>
    %c0_11 = arith.constant 0 : index
    %c0_12 = arith.constant 0 : index
    %37 = vector.load %arg6[%c0_11, %c0_12] : memref<2x256xf32, #tpu.memory_space<vmem>>, vector<2x256xf32>
    %cst_13 = arith.constant dense<0.000000e+00> : vector<2x128xf32>
    %38 = tpu.matmul %37, %36, %cst_13 {dimension_numbers = #tpu.dot_dimension_numbers<[1], [0], [0], [1], [0, 0, 1, 1], [], []>} : vector<2x256xf32>, vector<256x128xf32>, vector<2x128xf32> -> vector<2x128xf32>
    %c0_14 = arith.constant 0 : index
    %c0_15 = arith.constant 0 : index
    %39 = vector.load %arg7[%c0_14, %c0_15] : memref<2x1xf32, #tpu.memory_space<vmem>>, vector<2x1xf32>
    %40 = vector.broadcast %39 : vector<2x1xf32> to vector<2x128xf32>
    %41 = arith.addf %38, %40 : vector<2x128xf32>
    %c0_16 = arith.constant 0 : index
    %c0_17 = arith.constant 0 : index
    %42 = vector.load %arg8[%c0_16, %c0_17] : memref<2x128xf32, #tpu.memory_space<vmem>>, vector<2x128xf32>
    tpu.vector_store %arg8[%c0_16, %c0_17], %41 {strides = array<i32>} : memref<2x128xf32, #tpu.memory_space<vmem>>, vector<2x128xf32>,
    return
  }
  func.func @transform_0(%arg0: i32) -> (i32, i32) {
    %c0_i32 = arith.constant 0 : i32
    %c0_i32_0 = arith.constant 0 : i32
    return %c0_i32, %arg0 : i32, i32
  }
  func.func @transform_1(%arg0: i32) -> (i32, i32) {
    %c0_i32 = arith.constant 0 : i32
    %c0_i32_0 = arith.constant 0 : i32
    %c0_i32_1 = arith.constant 0 : i32
    return %c0_i32, %c0_i32_0 : i32, i32
  }
  func.func @transform_2(%arg0: i32) -> (i32, i32) {
    %c0_i32 = arith.constant 0 : i32
    %c0_i32_0 = arith.constant 0 : i32
    %c0_i32_1 = arith.constant 0 : i32
    return %c0_i32, %c0_i32_0 : i32, i32
  }
  func.func @transform_3(%arg0: i32) -> (i32, i32) {
    %c0_i32 = arith.constant 0 : i32
    %c0_i32_0 = arith.constant 0 : i32
    %c0_i32_1 = arith.constant 0 : i32
    return %c0_i32, %c0_i32_0 : i32, i32
  }
  func.func @transform_4(%arg0: i32) -> (i32, i32) {
    %c0_i32 = arith.constant 0 : i32
    %c0_i32_0 = arith.constant 0 : i32
    %c0_i32_1 = arith.constant 0 : i32
    return %c0_i32, %c0_i32_0 : i32, i32
  }
  func.func @transform_5(%arg0: i32) -> (i32, i32) {
    %c0_i32 = arith.constant 0 : i32
    %c0_i32_0 = arith.constant 0 : i32
    %c0_i32_1 = arith.constant 0 : i32
    return %c0_i32, %c0_i32_0 : i32, i32
  }
  func.func @transform_6(%arg0: i32) -> (i32, i32) {
    %c0_i32 = arith.constant 0 : i32
    %c0_i32_0 = arith.constant 0 : i32
    %c0_i32_1 = arith.constant 0 : i32
    return %c0_i32, %c0_i32_0 : i32, i32
  }
  func.func @transform_7(%arg0: i32) -> (i32, i32) {
    %c0_i32 = arith.constant 0 : i32
    %c0_i32_0 = arith.constant 0 : i32
    return %c0_i32, %arg0 : i32, i32
  }
}

</mosaic_0001>

<llo_original>
// kernel: tpu_custom_call.1
$region0: #{tpu_custom_call.1}
  #allocation0 [shape = 'u32[]', space=smem, size = 0x4, offset = 0x4, fixed_abs, tag = 'smem constant byte address 0x4 - core index']
  #allocation1 [shape = 'u32[144,128]{1,0:T(1,128)}', space=vmem, size = 0x12000, scoped, tag = 'internal scratch']
  %s0 = inlined_call_operand.vmem [shape: f32[4,128], index: 0, kind: input, shape index: {}]
  %s1 = inlined_call_operand.vmem [shape: f32[128,4], index: 1, kind: input, shape index: {}]
  %s2 = inlined_call_operand.vmem [shape: f32[128,1], index: 2, kind: input, shape index: {}]
  %s3 = inlined_call_operand.vmem [shape: f32[256,128], index: 3, kind: input, shape index: {}]
  %s4 = inlined_call_operand.vmem [shape: f32[256,1], index: 4, kind: input, shape index: {}]
  %s5 = inlined_call_operand.vmem [shape: f32[2,256], index: 5, kind: input, shape index: {}]
  %s6 = inlined_call_operand.vmem [shape: f32[2,1], index: 6, kind: input, shape index: {}]
  %s7 = inlined_call_operand.hbm [shape: f32[2,128], index: 7, kind: output, shape index: {}]
  %s8 = sld [smem:[#allocation0]]
  $region38: #{tpu_custom_call.1} parent=0
    _
  %s10 = ssub.s32 1, %s8
  %s11 = scalar_select 0, %s10, %s8
  $region1: #{tpu_custom_call.1} parent=0
    #allocation2 [shape = 'u8[1024]{0}', space=vmem, size = 0x400, scoped, tag = 'output window, operand 0, single buffered']
    #allocation3 [shape = 's32[1]{0}', space=sflag, size = 0x4, scoped, tag = 'scoped memory for tpu_custom_call.1']
    %12 = vsyncpa [#allocation3], 0
    // Predicated region
    $region2: #{tpu_custom_call.1} parent=1 // pred_check
      _
    $region3: #{tpu_custom_call.1} parent=1 // pred_check_branch
      %14 = sbr.rel (0) target = $region5
    $region4: #{tpu_custom_call.1} parent=1 // pred_region
      _
    $region5: #{tpu_custom_call.1} parent=1 // pred_fallthru
      _
    // Predicated region
    $region6: #{tpu_custom_call.1} parent=1 // pred_check
      _
    $region7: #{tpu_custom_call.1} parent=1 // pred_check_branch
      %16 = sbr.rel (0) target = $region9
    $region8: #{tpu_custom_call.1} parent=1 // pred_region
      _
    $region9: #{tpu_custom_call.1} parent=1 // pred_fallthru
      _
    // Predicated region
    $region10: #{tpu_custom_call.1} parent=1 // pred_check
      _
    $region11: #{tpu_custom_call.1} parent=1 // pred_check_branch
      %18 = sbr.rel (0) target = $region13
    $region12: #{tpu_custom_call.1} parent=1 // pred_region
      _
    $region13: #{tpu_custom_call.1} parent=1 // pred_fallthru
      _
    // Predicated region
    $region14: #{tpu_custom_call.1} parent=1 // pred_check
      _
    $region15: #{tpu_custom_call.1} parent=1 // pred_check_branch
      %20 = sbr.rel (0) target = $region17
    $region16: #{tpu_custom_call.1} parent=1 // pred_region
      _
    $region17: #{tpu_custom_call.1} parent=1 // pred_fallthru
      _
    // Predicated region
    $region18: #{tpu_custom_call.1} parent=1 // pred_check
      _
    $region19: #{tpu_custom_call.1} parent=1 // pred_check_branch
      %22 = sbr.rel (0) target = $region21
    $region20: #{tpu_custom_call.1} parent=1 // pred_region
      _
    $region21: #{tpu_custom_call.1} parent=1 // pred_fallthru
      _
    // Predicated region
    $region22: #{tpu_custom_call.1} parent=1 // pred_check
      _
    $region23: #{tpu_custom_call.1} parent=1 // pred_check_branch
      %24 = sbr.rel (0) target = $region25
    $region24: #{tpu_custom_call.1} parent=1 // pred_region
      _
    $region25: #{tpu_custom_call.1} parent=1 // pred_fallthru
      _
    // Predicated region
    $region26: #{tpu_custom_call.1} parent=1 // pred_check
      _
    $region27: #{tpu_custom_call.1} parent=1 // pred_check_branch
      %26 = sbr.rel (0) target = $region29
    $region28: #{tpu_custom_call.1} parent=1 // pred_region
      _
    $region29: #{tpu_custom_call.1} parent=1 // pred_fallthru
      _
    %v27 = vld [vmem:[%s0] sm:$0xf]
    %v28 = vld [vmem:[%s1] sm:$0xff]
    %v29 = vld [vmem:[%s1 + $0x8] sm:$0xff]
    %v30 = vld [vmem:[%s1 + $0x10] sm:$0xff]
    %v31 = vld [vmem:[%s1 + $0x18] sm:$0xff]
    %v32 = vld [vmem:[%s1 + $0x20] sm:$0xff]
    %v33 = vld [vmem:[%s1 + $0x28] sm:$0xff]
    %v34 = vld [vmem:[%s1 + $0x30] sm:$0xff]
    %v35 = vld [vmem:[%s1 + $0x38] sm:$0xff]
    %v36 = vld [vmem:[%s1 + $0x40] sm:$0xff]
    %v37 = vld [vmem:[%s1 + $0x48] sm:$0xff]
    %v38 = vld [vmem:[%s1 + $0x50] sm:$0xff]
    %v39 = vld [vmem:[%s1 + $0x58] sm:$0xff]
    %v40 = vld [vmem:[%s1 + $0x60] sm:$0xff]
    %v41 = vld [vmem:[%s1 + $0x68] sm:$0xff]
    %v42 = vld [vmem:[%s1 + $0x70] sm:$0xff]
    %v43 = vld [vmem:[%s1 + $0x78] sm:$0xff]
    %45 = vset.pattern.permute.xlu0 0
    %46 = vperm.xlu0 %45, %v28
    %v47 = vpop.permute.xlu0 %46
    %50 = vset.pattern.permute.xlu0 0
    %51 = vperm.xlu0 %50, %v29
    %v52 = vpop.permute.xlu0 %51
    %55 = vset.pattern.permute.xlu0 0
    %56 = vperm.xlu0 %55, %v30
    %v57 = vpop.permute.xlu0 %56
    %60 = vset.pattern.permute.xlu0 0
    %61 = vperm.xlu0 %60, %v31
    %v62 = vpop.permute.xlu0 %61
    %65 = vset.pattern.permute.xlu0 0
    %66 = vperm.xlu0 %65, %v32
    %v67 = vpop.permute.xlu0 %66
    %70 = vset.pattern.permute.xlu0 0
    %71 = vperm.xlu0 %70, %v33
    %v72 = vpop.permute.xlu0 %71
    %75 = vset.pattern.permute.xlu0 0
    %76 = vperm.xlu0 %75, %v34
    %v77 = vpop.permute.xlu0 %76
    %80 = vset.pattern.permute.xlu0 0
    %81 = vperm.xlu0 %80, %v35
    %v82 = vpop.permute.xlu0 %81
    %85 = vset.pattern.permute.xlu0 0
    %86 = vperm.xlu0 %85, %v36
    %v87 = vpop.permute.xlu0 %86
    %90 = vset.pattern.permute.xlu0 0
    %91 = vperm.xlu0 %90, %v37
    %v92 = vpop.permute.xlu0 %91
    %95 = vset.pattern.permute.xlu0 0
    %96 = vperm.xlu0 %95, %v38
    %v97 = vpop.permute.xlu0 %96
    %100 = vset.pattern.permute.xlu0 0
    %101 = vperm.xlu0 %100, %v39
    %v102 = vpop.permute.xlu0 %101
    %105 = vset.pattern.permute.xlu0 0
    %106 = vperm.xlu0 %105, %v40
    %v107 = vpop.permute.xlu0 %106
    %110 = vset.pattern.permute.xlu0 0
    %111 = vperm.xlu0 %110, %v41
    %v112 = vpop.permute.xlu0 %111
    %115 = vset.pattern.permute.xlu0 0
    %116 = vperm.xlu0 %115, %v42
    %v117 = vpop.permute.xlu0 %116
    %120 = vset.pattern.permute.xlu0 0
    %121 = vperm.xlu0 %120, %v43
    %v122 = vpop.permute.xlu0 %121
    %v124 = vlaneseq
    %v125 = vshrl.u32 %v124, 7
    %v126 = vsub.s32 0, %v125
    %v127 = vrot.slane %v27, %v126
    %v128 = vmul.f32 %v47, %v127
    %v129 = vmul.f32 %v52, %v127
    %v130 = vmul.f32 %v57, %v127
    %v131 = vmul.f32 %v62, %v127
    %v132 = vmul.f32 %v67, %v127
    %v133 = vmul.f32 %v72, %v127
    %v134 = vmul.f32 %v77, %v127
    %v135 = vmul.f32 %v82, %v127
    %v136 = vmul.f32 %v87, %v127
    %v137 = vmul.f32 %v92, %v127
    %v138 = vmul.f32 %v97, %v127
    %v139 = vmul.f32 %v102, %v127
    %v140 = vmul.f32 %v107, %v127
    %v141 = vmul.f32 %v112, %v127
    %v142 = vmul.f32 %v117, %v127
    %v143 = vmul.f32 %v122, %v127
    %v144 = vld [vmem:[%s2] sm:$0xff]
    %v145 = vld [vmem:[%s2 + $0x8] sm:$0xff]
    %v146 = vld [vmem:[%s2 + $0x10] sm:$0xff]
    %v147 = vld [vmem:[%s2 + $0x18] sm:$0xff]
    %v148 = vld [vmem:[%s2 + $0x20] sm:$0xff]
    %v149 = vld [vmem:[%s2 + $0x28] sm:$0xff]
    %v150 = vld [vmem:[%s2 + $0x30] sm:$0xff]
    %v151 = vld [vmem:[%s2 + $0x38] sm:$0xff]
    %v152 = vld [vmem:[%s2 + $0x40] sm:$0xff]
    %v153 = vld [vmem:[%s2 + $0x48] sm:$0xff]
    %v154 = vld [vmem:[%s2 + $0x50] sm:$0xff]
    %v155 = vld [vmem:[%s2 + $0x58] sm:$0xff]
    %v156 = vld [vmem:[%s2 + $0x60] sm:$0xff]
    %v157 = vld [vmem:[%s2 + $0x68] sm:$0xff]
    %v158 = vld [vmem:[%s2 + $0x70] sm:$0xff]
    %v159 = vld [vmem:[%s2 + $0x78] sm:$0xff]
    %161 = vset.pattern.permute.xlu0 0
    %162 = vperm.xlu0 %161, %v144
    %v163 = vpop.permute.xlu0 %162
    %166 = vset.pattern.permute.xlu0 0
    %167 = vperm.xlu0 %166, %v145
    %v168 = vpop.permute.xlu0 %167
    %171 = vset.pattern.permute.xlu0 0
    %172 = vperm.xlu0 %171, %v146
    %v173 = vpop.permute.xlu0 %172
    %176 = vset.pattern.permute.xlu0 0
    %177 = vperm.xlu0 %176, %v147
    %v178 = vpop.permute.xlu0 %177
    %181 = vset.pattern.permute.xlu0 0
    %182 = vperm.xlu0 %181, %v148
    %v183 = vpop.permute.xlu0 %182
    %186 = vset.pattern.permute.xlu0 0
    %187 = vperm.xlu0 %186, %v149
    %v188 = vpop.permute.xlu0 %187
    %191 = vset.pattern.permute.xlu0 0
    %192 = vperm.xlu0 %191, %v150
    %v193 = vpop.permute.xlu0 %192
    %196 = vset.pattern.permute.xlu0 0
    %197 = vperm.xlu0 %196, %v151
    %v198 = vpop.permute.xlu0 %197
    %201 = vset.pattern.permute.xlu0 0
    %202 = vperm.xlu0 %201, %v152
    %v203 = vpop.permute.xlu0 %202
    %206 = vset.pattern.permute.xlu0 0
    %207 = vperm.xlu0 %206, %v153
    %v208 = vpop.permute.xlu0 %207
    %211 = vset.pattern.permute.xlu0 0
    %212 = vperm.xlu0 %211, %v154
    %v213 = vpop.permute.xlu0 %212
    %216 = vset.pattern.permute.xlu0 0
    %217 = vperm.xlu0 %216, %v155
    %v218 = vpop.permute.xlu0 %217
    %221 = vset.pattern.permute.xlu0 0
    %222 = vperm.xlu0 %221, %v156
    %v223 = vpop.permute.xlu0 %222
    %226 = vset.pattern.permute.xlu0 0
    %227 = vperm.xlu0 %226, %v157
    %v228 = vpop.permute.xlu0 %227
    %231 = vset.pattern.permute.xlu0 0
    %232 = vperm.xlu0 %231, %v158
    %v233 = vpop.permute.xlu0 %232
    %236 = vset.pattern.permute.xlu0 0
    %237 = vperm.xlu0 %236, %v159
    %v238 = vpop.permute.xlu0 %237
    %v240 = vadd.f32 %v128, %v163
    %v241 = vadd.f32 %v129, %v168
    %v242 = vadd.f32 %v130, %v173
    %v243 = vadd.f32 %v131, %v178
    %v244 = vadd.f32 %v132, %v183
    %v245 = vadd.f32 %v133, %v188
    %v246 = vadd.f32 %v134, %v193
    %v247 = vadd.f32 %v135, %v198
    %v248 = vadd.f32 %v136, %v203
    %v249 = vadd.f32 %v137, %v208
    %v250 = vadd.f32 %v138, %v213
    %v251 = vadd.f32 %v139, %v218
    %v252 = vadd.f32 %v140, %v223
    %v253 = vadd.f32 %v141, %v228
    %v254 = vadd.f32 %v142, %v233
    %v255 = vadd.f32 %v143, %v238
    %256 = vset.pattern.permute.xlu0 1
    %257 = vperm.xlu0 %256, %v28
    %v258 = vpop.permute.xlu0 %257
    %260 = vset.pattern.permute.xlu0 1
    %261 = vperm.xlu0 %260, %v29
    %v262 = vpop.permute.xlu0 %261
    %264 = vset.pattern.permute.xlu0 1
    %265 = vperm.xlu0 %264, %v30
    %v266 = vpop.permute.xlu0 %265
    %268 = vset.pattern.permute.xlu0 1
    %269 = vperm.xlu0 %268, %v31
    %v270 = vpop.permute.xlu0 %269
    %272 = vset.pattern.permute.xlu0 1
    %273 = vperm.xlu0 %272, %v32
    %v274 = vpop.permute.xlu0 %273
    %276 = vset.pattern.permute.xlu0 1
    %277 = vperm.xlu0 %276, %v33
    %v278 = vpop.permute.xlu0 %277
    %280 = vset.pattern.permute.xlu0 1
    %281 = vperm.xlu0 %280, %v34
    %v282 = vpop.permute.xlu0 %281
    %284 = vset.pattern.permute.xlu0 1
    %285 = vperm.xlu0 %284, %v35
    %v286 = vpop.permute.xlu0 %285
    %288 = vset.pattern.permute.xlu0 1
    %289 = vperm.xlu0 %288, %v36
    %v290 = vpop.permute.xlu0 %289
    %292 = vset.pattern.permute.xlu0 1
    %293 = vperm.xlu0 %292, %v37
    %v294 = vpop.permute.xlu0 %293
    %296 = vset.pattern.permute.xlu0 1
    %297 = vperm.xlu0 %296, %v38
    %v298 = vpop.permute.xlu0 %297
    %300 = vset.pattern.permute.xlu0 1
    %301 = vperm.xlu0 %300, %v39
    %v302 = vpop.permute.xlu0 %301
    %304 = vset.pattern.permute.xlu0 1
    %305 = vperm.xlu0 %304, %v40
    %v306 = vpop.permute.xlu0 %305
    %308 = vset.pattern.permute.xlu0 1
    %309 = vperm.xlu0 %308, %v41
    %v310 = vpop.permute.xlu0 %309
    %312 = vset.pattern.permute.xlu0 1
    %313 = vperm.xlu0 %312, %v42
    %v314 = vpop.permute.xlu0 %313
    %316 = vset.pattern.permute.xlu0 1
    %317 = vperm.xlu0 %316, %v43
    %v318 = vpop.permute.xlu0 %317
    %v320 = vlaneseq
    %v321 = vshrl.u32 %v320, 7
    %v322 = vsub.s32 1, %v321
    %v323 = vrot.slane %v27, %v322
    %v324 = vmul.f32 %v258, %v323
    %v325 = vmul.f32 %v262, %v323
    %v326 = vmul.f32 %v266, %v323
    %v327 = vmul.f32 %v270, %v323
    %v328 = vmul.f32 %v274, %v323
    %v329 = vmul.f32 %v278, %v323
    %v330 = vmul.f32 %v282, %v323
    %v331 = vmul.f32 %v286, %v323
    %v332 = vmul.f32 %v290, %v323
    %v333 = vmul.f32 %v294, %v323
    %v334 = vmul.f32 %v298, %v323
    %v335 = vmul.f32 %v302, %v323
    %v336 = vmul.f32 %v306, %v323
    %v337 = vmul.f32 %v310, %v323
    %v338 = vmul.f32 %v314, %v323
    %v339 = vmul.f32 %v318, %v323
    %v340 = vadd.f32 %v240, %v324
    %v341 = vadd.f32 %v241, %v325
    %v342 = vadd.f32 %v242, %v326
    %v343 = vadd.f32 %v243, %v327
    %v344 = vadd.f32 %v244, %v328
    %v345 = vadd.f32 %v245, %v329
    %v346 = vadd.f32 %v246, %v330
    %v347 = vadd.f32 %v247, %v331
    %v348 = vadd.f32 %v248, %v332
    %v349 = vadd.f32 %v249, %v333
    %v350 = vadd.f32 %v250, %v334
    %v351 = vadd.f32 %v251, %v335
    %v352 = vadd.f32 %v252, %v336
    %v353 = vadd.f32 %v253, %v337
    %v354 = vadd.f32 %v254, %v338
    %v355 = vadd.f32 %v255, %v339
    %356 = vset.pattern.permute.xlu0 2
    %357 = vperm.xlu0 %356, %v28
    %v358 = vpop.permute.xlu0 %357
    %360 = vset.pattern.permute.xlu0 2
    %361 = vperm.xlu0 %360, %v29
    %v362 = vpop.permute.xlu0 %361
    %364 = vset.pattern.permute.xlu0 2
    %365 = vperm.xlu0 %364, %v30
    %v366 = vpop.permute.xlu0 %365
    %368 = vset.pattern.permute.xlu0 2
    %369 = vperm.xlu0 %368, %v31
    %v370 = vpop.permute.xlu0 %369
    %372 = vset.pattern.permute.xlu0 2
    %373 = vperm.xlu0 %372, %v32
    %v374 = vpop.permute.xlu0 %373
    %376 = vset.pattern.permute.xlu0 2
    %377 = vperm.xlu0 %376, %v33
    %v378 = vpop.permute.xlu0 %377
    %380 = vset.pattern.permute.xlu0 2
    %381 = vperm.xlu0 %380, %v34
    %v382 = vpop.permute.xlu0 %381
    %384 = vset.pattern.permute.xlu0 2
    %385 = vperm.xlu0 %384, %v35
    %v386 = vpop.permute.xlu0 %385
    %388 = vset.pattern.permute.xlu0 2
    %389 = vperm.xlu0 %388, %v36
    %v390 = vpop.permute.xlu0 %389
    %392 = vset.pattern.permute.xlu0 2
    %393 = vperm.xlu0 %392, %v37
    %v394 = vpop.permute.xlu0 %393
    %396 = vset.pattern.permute.xlu0 2
    %397 = vperm.xlu0 %396, %v38
    %v398 = vpop.permute.xlu0 %397
    %400 = vset.pattern.permute.xlu0 2
    %401 = vperm.xlu0 %400, %v39
    %v402 = vpop.permute.xlu0 %401
    %404 = vset.pattern.permute.xlu0 2
    %405 = vperm.xlu0 %404, %v40
    %v406 = vpop.permute.xlu0 %405
    %408 = vset.pattern.permute.xlu0 2
    %409 = vperm.xlu0 %408, %v41
    %v410 = vpop.permute.xlu0 %409
    %412 = vset.pattern.permute.xlu0 2
    %413 = vperm.xlu0 %412, %v42
    %v414 = vpop.permute.xlu0 %413
    %416 = vset.pattern.permute.xlu0 2
    %417 = vperm.xlu0 %416, %v43
    %v418 = vpop.permute.xlu0 %417
    %v420 = vlaneseq
    %v421 = vshrl.u32 %v420, 7
    %v422 = vsub.s32 2, %v421
    %v423 = vrot.slane %v27, %v422
    %v424 = vmul.f32 %v358, %v423
    %v425 = vmul.f32 %v362, %v423
    %v426 = vmul.f32 %v366, %v423
    %v427 = vmul.f32 %v370, %v423
    %v428 = vmul.f32 %v374, %v423
    %v429 = vmul.f32 %v378, %v423
    %v430 = vmul.f32 %v382, %v423
    %v431 = vmul.f32 %v386, %v423
    %v432 = vmul.f32 %v390, %v423
    %v433 = vmul.f32 %v394, %v423
    %v434 = vmul.f32 %v398, %v423
    %v435 = vmul.f32 %v402, %v423
    %v436 = vmul.f32 %v406, %v423
    %v437 = vmul.f32 %v410, %v423
    %v438 = vmul.f32 %v414, %v423
    %v439 = vmul.f32 %v418, %v423
    %440 = vset.pattern.permute.xlu0 3
    %441 = vperm.xlu0 %440, %v28
    %v442 = vpop.permute.xlu0 %441
    %444 = vset.pattern.permute.xlu0 3
    %445 = vperm.xlu0 %444, %v29
    %v446 = vpop.permute.xlu0 %445
    %448 = vset.pattern.permute.xlu0 3
    %449 = vperm.xlu0 %448, %v30
    %v450 = vpop.permute.xlu0 %449
    %452 = vset.pattern.permute.xlu0 3
    %453 = vperm.xlu0 %452, %v31
    %v454 = vpop.permute.xlu0 %453
    %456 = vset.pattern.permute.xlu0 3
    %457 = vperm.xlu0 %456, %v32
    %v458 = vpop.permute.xlu0 %457
    %460 = vset.pattern.permute.xlu0 3
    %461 = vperm.xlu0 %460, %v33
    %v462 = vpop.permute.xlu0 %461
    %464 = vset.pattern.permute.xlu0 3
    %465 = vperm.xlu0 %464, %v34
    %v466 = vpop.permute.xlu0 %465
    %468 = vset.pattern.permute.xlu0 3
    %469 = vperm.xlu0 %468, %v35
    %v470 = vpop.permute.xlu0 %469
    %472 = vset.pattern.permute.xlu0 3
    %473 = vperm.xlu0 %472, %v36
    %v474 = vpop.permute.xlu0 %473
    %476 = vset.pattern.permute.xlu0 3
    %477 = vperm.xlu0 %476, %v37
    %v478 = vpop.permute.xlu0 %477
    %480 = vset.pattern.permute.xlu0 3
    %481 = vperm.xlu0 %480, %v38
    %v482 = vpop.permute.xlu0 %481
    %484 = vset.pattern.permute.xlu0 3
    %485 = vperm.xlu0 %484, %v39
    %v486 = vpop.permute.xlu0 %485
    %488 = vset.pattern.permute.xlu0 3
    %489 = vperm.xlu0 %488, %v40
    %v490 = vpop.permute.xlu0 %489
    %492 = vset.pattern.permute.xlu0 3
    %493 = vperm.xlu0 %492, %v41
    %v494 = vpop.permute.xlu0 %493
    %496 = vset.pattern.permute.xlu0 3
    %497 = vperm.xlu0 %496, %v42
    %v498 = vpop.permute.xlu0 %497
    %500 = vset.pattern.permute.xlu0 3
    %501 = vperm.xlu0 %500, %v43
    %v502 = vpop.permute.xlu0 %501
    %v504 = vlaneseq
    %v505 = vshrl.u32 %v504, 7
    %v506 = vsub.s32 3, %v505
    %v507 = vrot.slane %v27, %v506
    %v508 = vmul.f32 %v442, %v507
    %v509 = vmul.f32 %v446, %v507
    %v510 = vmul.f32 %v450, %v507
    %v511 = vmul.f32 %v454, %v507
    %v512 = vmul.f32 %v458, %v507
    %v513 = vmul.f32 %v462, %v507
    %v514 = vmul.f32 %v466, %v507
    %v515 = vmul.f32 %v470, %v507
    %v516 = vmul.f32 %v474, %v507
    %v517 = vmul.f32 %v478, %v507
    %v518 = vmul.f32 %v482, %v507
    %v519 = vmul.f32 %v486, %v507
    %v520 = vmul.f32 %v490, %v507
    %v521 = vmul.f32 %v494, %v507
    %v522 = vmul.f32 %v498, %v507
    %v523 = vmul.f32 %v502, %v507
    %v524 = vadd.f32 %v424, %v508
    %v525 = vadd.f32 %v425, %v509
    %v526 = vadd.f32 %v426, %v510
    %v527 = vadd.f32 %v427, %v511
    %v528 = vadd.f32 %v428, %v512
    %v529 = vadd.f32 %v429, %v513
    %v530 = vadd.f32 %v430, %v514
    %v531 = vadd.f32 %v431, %v515
    %v532 = vadd.f32 %v432, %v516
    %v533 = vadd.f32 %v433, %v517
    %v534 = vadd.f32 %v434, %v518
    %v535 = vadd.f32 %v435, %v519
    %v536 = vadd.f32 %v436, %v520
    %v537 = vadd.f32 %v437, %v521
    %v538 = vadd.f32 %v438, %v522
    %v539 = vadd.f32 %v439, %v523
    %v540 = vadd.f32 %v340, %v524
    %v541 = vadd.f32 %v341, %v525
    %v542 = vadd.f32 %v342, %v526
    %v543 = vadd.f32 %v343, %v527
    %v544 = vadd.f32 %v344, %v528
    %v545 = vadd.f32 %v345, %v529
    %v546 = vadd.f32 %v346, %v530
    %v547 = vadd.f32 %v347, %v531
    %v548 = vadd.f32 %v348, %v532
    %v549 = vadd.f32 %v349, %v533
    %v550 = vadd.f32 %v350, %v534
    %v551 = vadd.f32 %v351, %v535
    %v552 = vadd.f32 %v352, %v536
    %v553 = vadd.f32 %v353, %v537
    %v554 = vadd.f32 %v354, %v538
    %v555 = vadd.f32 %v355, %v539
    %v556 = vmax.f32 %v540, 0.0
    %v557 = vmax.f32 %v541, 0.0
    %v558 = vmax.f32 %v542, 0.0
    %v559 = vmax.f32 %v543, 0.0
    %v560 = vmax.f32 %v544, 0.0
    %v561 = vmax.f32 %v545, 0.0
    %v562 = vmax.f32 %v546, 0.0
    %v563 = vmax.f32 %v547, 0.0
    %v564 = vmax.f32 %v548, 0.0
    %v565 = vmax.f32 %v549, 0.0
    %v566 = vmax.f32 %v550, 0.0
    %v567 = vmax.f32 %v551, 0.0
    %v568 = vmax.f32 %v552, 0.0
    %v569 = vmax.f32 %v553, 0.0
    %v570 = vmax.f32 %v554, 0.0
    %v571 = vmax.f32 %v555, 0.0
    %v572 = vld [vmem:[%s3] sm:$0xff]
    %v573 = vld [vmem:[%s3 + $0x8] sm:$0xff]
    %v574 = vld [vmem:[%s3 + $0x10] sm:$0xff]
    %v575 = vld [vmem:[%s3 + $0x18] sm:$0xff]
    %v576 = vld [vmem:[%s3 + $0x20] sm:$0xff]
    %v577 = vld [vmem:[%s3 + $0x28] sm:$0xff]
    %v578 = vld [vmem:[%s3 + $0x30] sm:$0xff]
    %v579 = vld [vmem:[%s3 + $0x38] sm:$0xff]
    %v580 = vld [vmem:[%s3 + $0x40] sm:$0xff]
    %v581 = vld [vmem:[%s3 + $0x48] sm:$0xff]
    %v582 = vld [vmem:[%s3 + $0x50] sm:$0xff]
    %v583 = vld [vmem:[%s3 + $0x58] sm:$0xff]
    %v584 = vld [vmem:[%s3 + $0x60] sm:$0xff]
    %v585 = vld [vmem:[%s3 + $0x68] sm:$0xff]
    %v586 = vld [vmem:[%s3 + $0x70] sm:$0xff]
    %v587 = vld [vmem:[%s3 + $0x78] sm:$0xff]
    %v588 = vld [vmem:[%s3 + $0x80] sm:$0xff]
    %v589 = vld [vmem:[%s3 + $0x88] sm:$0xff]
    %v590 = vld [vmem:[%s3 + $0x90] sm:$0xff]
    %v591 = vld [vmem:[%s3 + $0x98] sm:$0xff]
    %v592 = vld [vmem:[%s3 + $0xa0] sm:$0xff]
    %v593 = vld [vmem:[%s3 + $0xa8] sm:$0xff]
    %v594 = vld [vmem:[%s3 + $0xb0] sm:$0xff]
    %v595 = vld [vmem:[%s3 + $0xb8] sm:$0xff]
    %v596 = vld [vmem:[%s3 + $0xc0] sm:$0xff]
    %v597 = vld [vmem:[%s3 + $0xc8] sm:$0xff]
    %v598 = vld [vmem:[%s3 + $0xd0] sm:$0xff]
    %v599 = vld [vmem:[%s3 + $0xd8] sm:$0xff]
    %v600 = vld [vmem:[%s3 + $0xe0] sm:$0xff]
    %v601 = vld [vmem:[%s3 + $0xe8] sm:$0xff]
    %v602 = vld [vmem:[%s3 + $0xf0] sm:$0xff]
    %v603 = vld [vmem:[%s3 + $0xf8] sm:$0xff]
    %v604 = vld [vmem:[%s4] sm:$0xff]
    %v605 = vld [vmem:[%s4 + $0x8] sm:$0xff]
    %v606 = vld [vmem:[%s4 + $0x10] sm:$0xff]
    %v607 = vld [vmem:[%s4 + $0x18] sm:$0xff]
    %v608 = vld [vmem:[%s4 + $0x20] sm:$0xff]
    %v609 = vld [vmem:[%s4 + $0x28] sm:$0xff]
    %v610 = vld [vmem:[%s4 + $0x30] sm:$0xff]
    %v611 = vld [vmem:[%s4 + $0x38] sm:$0xff]
    %v612 = vld [vmem:[%s4 + $0x40] sm:$0xff]
    %v613 = vld [vmem:[%s4 + $0x48] sm:$0xff]
    %v614 = vld [vmem:[%s4 + $0x50] sm:$0xff]
    %v615 = vld [vmem:[%s4 + $0x58] sm:$0xff]
    %v616 = vld [vmem:[%s4 + $0x60] sm:$0xff]
    %v617 = vld [vmem:[%s4 + $0x68] sm:$0xff]
    %v618 = vld [vmem:[%s4 + $0x70] sm:$0xff]
    %v619 = vld [vmem:[%s4 + $0x78] sm:$0xff]
    %v620 = vld [vmem:[%s4 + $0x80] sm:$0xff]
    %v621 = vld [vmem:[%s4 + $0x88] sm:$0xff]
    %v622 = vld [vmem:[%s4 + $0x90] sm:$0xff]
    %v623 = vld [vmem:[%s4 + $0x98] sm:$0xff]
    %v624 = vld [vmem:[%s4 + $0xa0] sm:$0xff]
    %v625 = vld [vmem:[%s4 + $0xa8] sm:$0xff]
    %v626 = vld [vmem:[%s4 + $0xb0] sm:$0xff]
    %v627 = vld [vmem:[%s4 + $0xb8] sm:$0xff]
    %v628 = vld [vmem:[%s4 + $0xc0] sm:$0xff]
    %v629 = vld [vmem:[%s4 + $0xc8] sm:$0xff]
    %v630 = vld [vmem:[%s4 + $0xd0] sm:$0xff]
    %v631 = vld [vmem:[%s4 + $0xd8] sm:$0xff]
    %v632 = vld [vmem:[%s4 + $0xe0] sm:$0xff]
    %v633 = vld [vmem:[%s4 + $0xe8] sm:$0xff]
    %v634 = vld [vmem:[%s4 + $0xf0] sm:$0xff]
    %v635 = vld [vmem:[%s4 + $0xf8] sm:$0xff]
    %637 = vset.pattern.permute.xlu0 0
    %638 = vperm.xlu0 %637, %v604
    %v639 = vpop.permute.xlu0 %638
    %642 = vset.pattern.permute.xlu0 0
    %643 = vperm.xlu0 %642, %v605
    %v644 = vpop.permute.xlu0 %643
    %647 = vset.pattern.permute.xlu0 0
    %648 = vperm.xlu0 %647, %v606
    %v649 = vpop.permute.xlu0 %648
    %652 = vset.pattern.permute.xlu0 0
    %653 = vperm.xlu0 %652, %v607
    %v654 = vpop.permute.xlu0 %653
    %657 = vset.pattern.permute.xlu0 0
    %658 = vperm.xlu0 %657, %v608
    %v659 = vpop.permute.xlu0 %658
    %662 = vset.pattern.permute.xlu0 0
    %663 = vperm.xlu0 %662, %v609
    %v664 = vpop.permute.xlu0 %663
    %667 = vset.pattern.permute.xlu0 0
    %668 = vperm.xlu0 %667, %v610
    %v669 = vpop.permute.xlu0 %668
    %672 = vset.pattern.permute.xlu0 0
    %673 = vperm.xlu0 %672, %v611
    %v674 = vpop.permute.xlu0 %673
    %677 = vset.pattern.permute.xlu0 0
    %678 = vperm.xlu0 %677, %v612
    %v679 = vpop.permute.xlu0 %678
    %682 = vset.pattern.permute.xlu0 0
    %683 = vperm.xlu0 %682, %v613
    %v684 = vpop.permute.xlu0 %683
    %687 = vset.pattern.permute.xlu0 0
    %688 = vperm.xlu0 %687, %v614
    %v689 = vpop.permute.xlu0 %688
    %692 = vset.pattern.permute.xlu0 0
    %693 = vperm.xlu0 %692, %v615
    %v694 = vpop.permute.xlu0 %693
    %697 = vset.pattern.permute.xlu0 0
    %698 = vperm.xlu0 %697, %v616
    %v699 = vpop.permute.xlu0 %698
    %702 = vset.pattern.permute.xlu0 0
    %703 = vperm.xlu0 %702, %v617
    %v704 = vpop.permute.xlu0 %703
    %707 = vset.pattern.permute.xlu0 0
    %708 = vperm.xlu0 %707, %v618
    %v709 = vpop.permute.xlu0 %708
    %712 = vset.pattern.permute.xlu0 0
    %713 = vperm.xlu0 %712, %v619
    %v714 = vpop.permute.xlu0 %713
    %717 = vset.pattern.permute.xlu0 0
    %718 = vperm.xlu0 %717, %v620
    %v719 = vpop.permute.xlu0 %718
    %722 = vset.pattern.permute.xlu0 0
    %723 = vperm.xlu0 %722, %v621
    %v724 = vpop.permute.xlu0 %723
    %727 = vset.pattern.permute.xlu0 0
    %728 = vperm.xlu0 %727, %v622
    %v729 = vpop.permute.xlu0 %728
    %732 = vset.pattern.permute.xlu0 0
    %733 = vperm.xlu0 %732, %v623
    %v734 = vpop.permute.xlu0 %733
    %737 = vset.pattern.permute.xlu0 0
    %738 = vperm.xlu0 %737, %v624
    %v739 = vpop.permute.xlu0 %738
    %742 = vset.pattern.permute.xlu0 0
    %743 = vperm.xlu0 %742, %v625
    %v744 = vpop.permute.xlu0 %743
    %747 = vset.pattern.permute.xlu0 0
    %748 = vperm.xlu0 %747, %v626
    %v749 = vpop.permute.xlu0 %748
    %752 = vset.pattern.permute.xlu0 0
    %753 = vperm.xlu0 %752, %v627
    %v754 = vpop.permute.xlu0 %753
    %757 = vset.pattern.permute.xlu0 0
    %758 = vperm.xlu0 %757, %v628
    %v759 = vpop.permute.xlu0 %758
    %762 = vset.pattern.permute.xlu0 0
    %763 = vperm.xlu0 %762, %v629
    %v764 = vpop.permute.xlu0 %763
    %767 = vset.pattern.permute.xlu0 0
    %768 = vperm.xlu0 %767, %v630
    %v769 = vpop.permute.xlu0 %768
    %772 = vset.pattern.permute.xlu0 0
    %773 = vperm.xlu0 %772, %v631
    %v774 = vpop.permute.xlu0 %773
    %777 = vset.pattern.permute.xlu0 0
    %778 = vperm.xlu0 %777, %v632
    %v779 = vpop.permute.xlu0 %778
    %782 = vset.pattern.permute.xlu0 0
    %783 = vperm.xlu0 %782, %v633
    %v784 = vpop.permute.xlu0 %783
    %787 = vset.pattern.permute.xlu0 0
    %788 = vperm.xlu0 %787, %v634
    %v789 = vpop.permute.xlu0 %788
    %792 = vset.pattern.permute.xlu0 0
    %793 = vperm.xlu0 %792, %v635
    %v794 = vpop.permute.xlu0 %793
    %796 = vmatprep.subr.mxu0 0.0
    %797 = vmatpush1.msra.mxu0 %v556
    %798 = vmatprep.subr.mxu0 0.0
    %799 = vmatpush1.msra.mxu0 %v557
    %800 = vmatprep.subr.mxu0 0.0
    %801 = vmatpush1.msra.mxu0 %v558
    %802 = vmatprep.subr.mxu0 0.0
    %803 = vmatpush1.msra.mxu0 %v559
    %804 = vmatprep.subr.mxu0 0.0
    %805 = vmatpush1.msra.mxu0 %v560
    %806 = vmatprep.subr.mxu0 0.0
    %807 = vmatpush1.msra.mxu0 %v561
    %808 = vmatprep.subr.mxu0 0.0
    %809 = vmatpush1.msra.mxu0 %v562
    %810 = vmatprep.subr.mxu0 0.0
    %811 = vmatpush1.msra.mxu0 %v563
    %812 = vmatprep.subr.mxu0 0.0
    %813 = vmatpush1.msra.mxu0 %v564
    %814 = vmatprep.subr.mxu0 0.0
    %815 = vmatpush1.msra.mxu0 %v565
    %816 = vmatprep.subr.mxu0 0.0
    %817 = vmatpush1.msra.mxu0 %v566
    %818 = vmatprep.subr.mxu0 0.0
    %819 = vmatpush1.msra.mxu0 %v567
    %820 = vmatprep.subr.mxu0 0.0
    %821 = vmatpush1.msra.mxu0 %v568
    %822 = vmatprep.subr.mxu0 0.0
    %823 = vmatpush1.msra.mxu0 %v569
    %824 = vmatprep.subr.mxu0 0.0
    %825 = vmatpush1.msra.mxu0 %v570
    %826 = vmatprep.subr.mxu0 0.0
    %827 = vmatpush1.msra.mxu0 %v571
    %828 = vmatprep.subr.mxu0 0.0
    %829 = vmatpush1.msra.mxu0 0.0
    %830 = vmatprep.subr.mxu0 0.0
    %831 = vmatpush1.msra.mxu0 0.0
    %832 = vmatprep.subr.mxu0 0.0
    %833 = vmatpush1.msra.mxu0 0.0
    %834 = vmatprep.subr.mxu0 0.0
    %835 = vmatpush1.msra.mxu0 0.0
    %836 = vmatprep.subr.mxu0 0.0
    %837 = vmatpush1.msra.mxu0 0.0
    %838 = vmatprep.subr.mxu0 0.0
    %839 = vmatpush1.msra.mxu0 0.0
    %840 = vmatprep.subr.mxu0 0.0
    %841 = vmatpush1.msra.mxu0 0.0
    %842 = vmatprep.subr.mxu0 0.0
    %843 = vmatpush1.msra.mxu0 0.0
    %844 = vmatprep.subr.mxu0 0.0
    %845 = vmatpush1.msra.mxu0 0.0
    %846 = vmatprep.subr.mxu0 0.0
    %847 = vmatpush1.msra.mxu0 0.0
    %848 = vmatprep.subr.mxu0 0.0
    %849 = vmatpush1.msra.mxu0 0.0
    %850 = vmatprep.subr.mxu0 0.0
    %851 = vmatpush1.msra.mxu0 0.0
    %852 = vmatprep.subr.mxu0 0.0
    %853 = vmatpush1.msra.mxu0 0.0
    %854 = vmatprep.subr.mxu0 0.0
    %855 = vmatpush1.msra.mxu0 0.0
    %856 = vmatprep.subr.mxu0 0.0
    %857 = vmatpush1.msra.mxu0 0.0
    %858 = vmatprep.subr.mxu0 0.0
    %859 = vmatpush1.msra.mxu0 0.0
    %860 = vmatprep.mubr.f32.mxu0 0.0
    %861 = vmatmul.mubr.f32.gmra.mrb[0].mxu0 %v572
    %v862 = vpop.f32.mrb[0].mxu0
    %v863 = vadd.f32 %v639, %v862
    %v864 = vpop.f32.mrb[0].mxu0
    %865 = vmatprep.mubr.f32.mxu0 0.0
    %866 = vmatmul.mubr.f32.gmra.mrb[0].mxu0 %v573
    %v867 = vpop.f32.mrb[0].mxu0
    %v868 = vadd.f32 %v644, %v867
    %v869 = vpop.f32.mrb[0].mxu0
    %870 = vmatprep.mubr.f32.mxu0 0.0
    %871 = vmatmul.mubr.f32.gmra.mrb[0].mxu0 %v574
    %v872 = vpop.f32.mrb[0].mxu0
    %v873 = vadd.f32 %v649, %v872
    %v874 = vpop.f32.mrb[0].mxu0
    %875 = vmatprep.mubr.f32.mxu0 0.0
    %876 = vmatmul.mubr.f32.gmra.mrb[0].mxu0 %v575
    %v877 = vpop.f32.mrb[0].mxu0
    %v878 = vadd.f32 %v654, %v877
    %v879 = vpop.f32.mrb[0].mxu0
    %880 = vmatprep.mubr.f32.mxu0 0.0
    %881 = vmatmul.mubr.f32.gmra.mrb[0].mxu0 %v576
    %v882 = vpop.f32.mrb[0].mxu0
    %v883 = vadd.f32 %v659, %v882
    %v884 = vpop.f32.mrb[0].mxu0
    %885 = vmatprep.mubr.f32.mxu0 0.0
    %886 = vmatmul.mubr.f32.gmra.mrb[0].mxu0 %v577
    %v887 = vpop.f32.mrb[0].mxu0
    %v888 = vadd.f32 %v664, %v887
    %v889 = vpop.f32.mrb[0].mxu0
    %890 = vmatprep.mubr.f32.mxu0 0.0
    %891 = vmatmul.mubr.f32.gmra.mrb[0].mxu0 %v578
    %v892 = vpop.f32.mrb[0].mxu0
    %v893 = vadd.f32 %v669, %v892
    %v894 = vpop.f32.mrb[0].mxu0
    %895 = vmatprep.mubr.f32.mxu0 0.0
    %896 = vmatmul.mubr.f32.gmra.mrb[0].mxu0 %v579
    %v897 = vpop.f32.mrb[0].mxu0
    %v898 = vadd.f32 %v674, %v897
    %v899 = vpop.f32.mrb[0].mxu0
    %900 = vmatprep.mubr.f32.mxu0 0.0
    %901 = vmatmul.mubr.f32.gmra.mrb[0].mxu0 %v580
    %v902 = vpop.f32.mrb[0].mxu0
    %v903 = vadd.f32 %v679, %v902
    %v904 = vpop.f32.mrb[0].mxu0
    %905 = vmatprep.mubr.f32.mxu0 0.0
    %906 = vmatmul.mubr.f32.gmra.mrb[0].mxu0 %v581
    %v907 = vpop.f32.mrb[0].mxu0
    %v908 = vadd.f32 %v684, %v907
    %v909 = vpop.f32.mrb[0].mxu0
    %910 = vmatprep.mubr.f32.mxu0 0.0
    %911 = vmatmul.mubr.f32.gmra.mrb[0].mxu0 %v582
    %v912 = vpop.f32.mrb[0].mxu0
    %v913 = vadd.f32 %v689, %v912
    %v914 = vpop.f32.mrb[0].mxu0
    %915 = vmatprep.mubr.f32.mxu0 0.0
    %916 = vmatmul.mubr.f32.gmra.mrb[0].mxu0 %v583
    %v917 = vpop.f32.mrb[0].mxu0
    %v918 = vadd.f32 %v694, %v917
    %v919 = vpop.f32.mrb[0].mxu0
    %920 = vmatprep.mubr.f32.mxu0 0.0
    %921 = vmatmul.mubr.f32.gmra.mrb[0].mxu0 %v584
    %v922 = vpop.f32.mrb[0].mxu0
    %v923 = vadd.f32 %v699, %v922
    %v924 = vpop.f32.mrb[0].mxu0
    %925 = vmatprep.mubr.f32.mxu0 0.0
    %926 = vmatmul.mubr.f32.gmra.mrb[0].mxu0 %v585
    %v927 = vpop.f32.mrb[0].mxu0
    %v928 = vadd.f32 %v704, %v927
    %v929 = vpop.f32.mrb[0].mxu0
    %930 = vmatprep.mubr.f32.mxu0 0.0
    %931 = vmatmul.mubr.f32.gmra.mrb[0].mxu0 %v586
    %v932 = vpop.f32.mrb[0].mxu0
    %v933 = vadd.f32 %v709, %v932
    %v934 = vpop.f32.mrb[0].mxu0
    %935 = vmatprep.mubr.f32.mxu0 0.0
    %936 = vmatmul.mubr.f32.gmra.mrb[0].mxu0 %v587
    %v937 = vpop.f32.mrb[0].mxu0
    %v938 = vadd.f32 %v714, %v937
    %v939 = vpop.f32.mrb[0].mxu0
    %940 = vmatprep.mubr.f32.mxu0 0.0
    %941 = vmatmul.mubr.f32.gmra.mrb[0].mxu0 %v588
    %v942 = vpop.f32.mrb[0].mxu0
    %v943 = vadd.f32 %v719, %v942
    %v944 = vpop.f32.mrb[0].mxu0
    %945 = vmatprep.mubr.f32.mxu0 0.0
    %946 = vmatmul.mubr.f32.gmra.mrb[0].mxu0 %v589
    %v947 = vpop.f32.mrb[0].mxu0
    %v948 = vadd.f32 %v724, %v947
    %v949 = vpop.f32.mrb[0].mxu0
    %950 = vmatprep.mubr.f32.mxu0 0.0
    %951 = vmatmul.mubr.f32.gmra.mrb[0].mxu0 %v590
    %v952 = vpop.f32.mrb[0].mxu0
    %v953 = vadd.f32 %v729, %v952
    %v954 = vpop.f32.mrb[0].mxu0
    %955 = vmatprep.mubr.f32.mxu0 0.0
    %956 = vmatmul.mubr.f32.gmra.mrb[0].mxu0 %v591
    %v957 = vpop.f32.mrb[0].mxu0
    %v958 = vadd.f32 %v734, %v957
    %v959 = vpop.f32.mrb[0].mxu0
    %960 = vmatprep.mubr.f32.mxu0 0.0
    %961 = vmatmul.mubr.f32.gmra.mrb[0].mxu0 %v592
    %v962 = vpop.f32.mrb[0].mxu0
    %v963 = vadd.f32 %v739, %v962
    %v964 = vpop.f32.mrb[0].mxu0
    %965 = vmatprep.mubr.f32.mxu0 0.0
    %966 = vmatmul.mubr.f32.gmra.mrb[0].mxu0 %v593
    %v967 = vpop.f32.mrb[0].mxu0
    %v968 = vadd.f32 %v744, %v967
    %v969 = vpop.f32.mrb[0].mxu0
    %970 = vmatprep.mubr.f32.mxu0 0.0
    %971 = vmatmul.mubr.f32.gmra.mrb[0].mxu0 %v594
    %v972 = vpop.f32.mrb[0].mxu0
    %v973 = vadd.f32 %v749, %v972
    %v974 = vpop.f32.mrb[0].mxu0
    %975 = vmatprep.mubr.f32.mxu0 0.0
    %976 = vmatmul.mubr.f32.gmra.mrb[0].mxu0 %v595
    %v977 = vpop.f32.mrb[0].mxu0
    %v978 = vadd.f32 %v754, %v977
    %v979 = vpop.f32.mrb[0].mxu0
    %980 = vmatprep.mubr.f32.mxu0 0.0
    %981 = vmatmul.mubr.f32.gmra.mrb[0].mxu0 %v596
    %v982 = vpop.f32.mrb[0].mxu0
    %v983 = vadd.f32 %v759, %v982
    %v984 = vpop.f32.mrb[0].mxu0
    %985 = vmatprep.mubr.f32.mxu0 0.0
    %986 = vmatmul.mubr.f32.gmra.mrb[0].mxu0 %v597
    %v987 = vpop.f32.mrb[0].mxu0
    %v988 = vadd.f32 %v764, %v987
    %v989 = vpop.f32.mrb[0].mxu0
    %990 = vmatprep.mubr.f32.mxu0 0.0
    %991 = vmatmul.mubr.f32.gmra.mrb[0].mxu0 %v598
    %v992 = vpop.f32.mrb[0].mxu0
    %v993 = vadd.f32 %v769, %v992
    %v994 = vpop.f32.mrb[0].mxu0
    %995 = vmatprep.mubr.f32.mxu0 0.0
    %996 = vmatmul.mubr.f32.gmra.mrb[0].mxu0 %v599
    %v997 = vpop.f32.mrb[0].mxu0
    %v998 = vadd.f32 %v774, %v997
    %v999 = vpop.f32.mrb[0].mxu0
    %1000 = vmatprep.mubr.f32.mxu0 0.0
    %1001 = vmatmul.mubr.f32.gmra.mrb[0].mxu0 %v600
    %v1002 = vpop.f32.mrb[0].mxu0
    %v1003 = vadd.f32 %v779, %v1002
    %v1004 = vpop.f32.mrb[0].mxu0
    %1005 = vmatprep.mubr.f32.mxu0 0.0
    %1006 = vmatmul.mubr.f32.gmra.mrb[0].mxu0 %v601
    %v1007 = vpop.f32.mrb[0].mxu0
    %v1008 = vadd.f32 %v784, %v1007
    %v1009 = vpop.f32.mrb[0].mxu0
    %1010 = vmatprep.mubr.f32.mxu0 0.0
    %1011 = vmatmul.mubr.f32.gmra.mrb[0].mxu0 %v602
    %v1012 = vpop.f32.mrb[0].mxu0
    %v1013 = vadd.f32 %v789, %v1012
    %v1014 = vpop.f32.mrb[0].mxu0
    %1015 = vmatprep.mubr.f32.mxu0 0.0
    %1016 = vmatmul.mubr.f32.gmra.mrb[0].mxu0 %v603
    %v1017 = vpop.f32.mrb[0].mxu0
    %v1018 = vadd.f32 %v794, %v1017
    %v1019 = vpop.f32.mrb[0].mxu0
    %1020 = vdwg.mxu0
    %v1021 = vmax.f32 %v863, 0.0
    %v1022 = vmax.f32 %v868, 0.0
    %v1023 = vmax.f32 %v873, 0.0
    %v1024 = vmax.f32 %v878, 0.0
    %v1025 = vmax.f32 %v883, 0.0
    %v1026 = vmax.f32 %v888, 0.0
    %v1027 = vmax.f32 %v893, 0.0
    %v1028 = vmax.f32 %v898, 0.0
    %v1029 = vmax.f32 %v903, 0.0
    %v1030 = vmax.f32 %v908, 0.0
    %v1031 = vmax.f32 %v913, 0.0
    %v1032 = vmax.f32 %v918, 0.0
    %v1033 = vmax.f32 %v923, 0.0
    %v1034 = vmax.f32 %v928, 0.0
    %v1035 = vmax.f32 %v933, 0.0
    %v1036 = vmax.f32 %v938, 0.0
    %v1037 = vmax.f32 %v943, 0.0
    %v1038 = vmax.f32 %v948, 0.0
    %v1039 = vmax.f32 %v953, 0.0
    %v1040 = vmax.f32 %v958, 0.0
    %v1041 = vmax.f32 %v963, 0.0
    %v1042 = vmax.f32 %v968, 0.0
    %v1043 = vmax.f32 %v973, 0.0
    %v1044 = vmax.f32 %v978, 0.0
    %v1045 = vmax.f32 %v983, 0.0
    %v1046 = vmax.f32 %v988, 0.0
    %v1047 = vmax.f32 %v993, 0.0
    %v1048 = vmax.f32 %v998, 0.0
    %v1049 = vmax.f32 %v1003, 0.0
    %v1050 = vmax.f32 %v1008, 0.0
    %v1051 = vmax.f32 %v1013, 0.0
    %v1052 = vmax.f32 %v1018, 0.0
    %v1053 = vld [vmem:[%s5] sm:$0xf]
    %v1054 = vld [vmem:[%s6] sm:$0x3]
    %1056 = vset.pattern.permute.xlu0 0
    %1057 = vperm.xlu0 %1056, %v1054
    %v1058 = vpop.permute.xlu0 %1057
    %v1062 = vunpack.c.l.s4 1983009808
    %v1063 = vunpack.c.0.s8 %v1062
    %v1064 = vlaneseq
    %v1065 = vshrl.u32 %v1064, 7
    %v1066 = vsub.s32 %v1063, %v1065
    %v1067 = vrot.slane %v1053, %v1066
    %v1068 = vcombine.high %v1067, %v1067
    %1071 = vmatprep.subr.mxu0 0.0
    %1072 = vmatpush1.msra.mxu0 %v1021
    %1073 = vmatprep.subr.mxu0 0.0
    %1074 = vmatpush1.msra.mxu0 %v1022
    %1075 = vmatprep.subr.mxu0 0.0
    %1076 = vmatpush1.msra.mxu0 %v1023
    %1077 = vmatprep.subr.mxu0 0.0
    %1078 = vmatpush1.msra.mxu0 %v1024
    %1079 = vmatprep.subr.mxu0 0.0
    %1080 = vmatpush1.msra.mxu0 %v1025
    %1081 = vmatprep.subr.mxu0 0.0
    %1082 = vmatpush1.msra.mxu0 %v1026
    %1083 = vmatprep.subr.mxu0 0.0
    %1084 = vmatpush1.msra.mxu0 %v1027
    %1085 = vmatprep.subr.mxu0 0.0
    %1086 = vmatpush1.msra.mxu0 %v1028
    %1087 = vmatprep.subr.mxu0 0.0
    %1088 = vmatpush1.msra.mxu0 %v1029
    %1089 = vmatprep.subr.mxu0 0.0
    %1090 = vmatpush1.msra.mxu0 %v1030
    %1091 = vmatprep.subr.mxu0 0.0
    %1092 = vmatpush1.msra.mxu0 %v1031
    %1093 = vmatprep.subr.mxu0 0.0
    %1094 = vmatpush1.msra.mxu0 %v1032
    %1095 = vmatprep.subr.mxu0 0.0
    %1096 = vmatpush1.msra.mxu0 %v1033
    %1097 = vmatprep.subr.mxu0 0.0
    %1098 = vmatpush1.msra.mxu0 %v1034
    %1099 = vmatprep.subr.mxu0 0.0
    %1100 = vmatpush1.msra.mxu0 %v1035
    %1101 = vmatprep.subr.mxu0 0.0
    %1102 = vmatpush1.msra.mxu0 %v1036
    %1103 = vmatprep.subr.mxu0 0.0
    %1104 = vmatpush1.msra.mxu0 %v1037
    %1105 = vmatprep.subr.mxu0 0.0
    %1106 = vmatpush1.msra.mxu0 %v1038
    %1107 = vmatprep.subr.mxu0 0.0
    %1108 = vmatpush1.msra.mxu0 %v1039
    %1109 = vmatprep.subr.mxu0 0.0
    %1110 = vmatpush1.msra.mxu0 %v1040
    %1111 = vmatprep.subr.mxu0 0.0
    %1112 = vmatpush1.msra.mxu0 %v1041
    %1113 = vmatprep.subr.mxu0 0.0
    %1114 = vmatpush1.msra.mxu0 %v1042
    %1115 = vmatprep.subr.mxu0 0.0
    %1116 = vmatpush1.msra.mxu0 %v1043
    %1117 = vmatprep.subr.mxu0 0.0
    %1118 = vmatpush1.msra.mxu0 %v1044
    %1119 = vmatprep.subr.mxu0 0.0
    %1120 = vmatpush1.msra.mxu0 %v1045
    %1121 = vmatprep.subr.mxu0 0.0
    %1122 = vmatpush1.msra.mxu0 %v1046
    %1123 = vmatprep.subr.mxu0 0.0
    %1124 = vmatpush1.msra.mxu0 %v1047
    %1125 = vmatprep.subr.mxu0 0.0
    %1126 = vmatpush1.msra.mxu0 %v1048
    %1127 = vmatprep.subr.mxu0 0.0
    %1128 = vmatpush1.msra.mxu0 %v1049
    %1129 = vmatprep.subr.mxu0 0.0
    %1130 = vmatpush1.msra.mxu0 %v1050
    %1131 = vmatprep.subr.mxu0 0.0
    %1132 = vmatpush1.msra.mxu0 %v1051
    %1133 = vmatprep.subr.mxu0 0.0
    %1134 = vmatpush1.msra.mxu0 %v1052
    %1135 = vmatprep.mubr.f32.mxu0 %v1068
    %1136 = vmatmul.mubr.f32.gmra.mrb[0].mxu0 %v1067
    %v1137 = vpop.f32.mrb[0].mxu0
    %v1138 = vadd.f32 %v1058, %v1137
    %v1139 = vpop.f32.mrb[0].mxu0
    %1140 = vdwg.mxu0
    %1141 = vst [vmem:[#allocation2] sm:$0x3] %v1138
    // Predicated region
    $region30: #{tpu_custom_call.1} parent=1 // pred_check
      _
    $region31: #{tpu_custom_call.1} parent=1 // pred_check_branch
      %1143 = sbr.rel (0) target = $region33
    $region32: #{tpu_custom_call.1} parent=1 // pred_region
      %s1145 = ssub.s32 32, 32
      %1146 = vsyncadd [#allocation3], %s1145
      %s1148 = sshll.u32 [#allocation2], 4
      %s1149 = int_to_ptr.vmem [resolvable:$true] %s1148
      %1151 = dma.vmem_to_hbm [thread:$0]  %s1149, 32, %s7, [#allocation3]
    $region33: #{tpu_custom_call.1} parent=1 // pred_fallthru
      _
    // Predicated region
    $region34: #{tpu_custom_call.1} parent=1 // pred_check
      _
    $region35: #{tpu_custom_call.1} parent=1 // pred_check_branch
      %1153 = sbr.rel (0) target = $region37
    $region36: #{tpu_custom_call.1} parent=1 // pred_region
      %1154 = dma.done [#allocation3], 32
    $region37: #{tpu_custom_call.1} parent=1 // pred_fallthru
      _
    %1155 = vsyncpa [#allocation3], 1

</llo_original>
